<compile_context>
chip_gen: v7x
topology: tpu7x:2x2x1
jax: 0.10.0
libtpu: 0.0.40
codegen_flags: <defaults>
</compile_context>

<pallas_src>
import math

import numpy as np
import jax
import jax.numpy as jnp
from jax.experimental import pallas as pl
from jax.experimental.pallas import tpu as pltpu

SIZES = (1, 2, 4, 6)       # pyramid pooling output sizes, as in the PyTorch module
LANE = 128                 # TPU lane width; pad the tiny rank axis to this


# ---------------------------------------------------------------------------
# Host-side construction of the (tiny) pooling / upsampling operators.
# ---------------------------------------------------------------------------
def _adaptive_pool_matrix(s, n):
    """P[s, n]: adaptive average pooling n -> s (PyTorch AdaptiveAvgPool2d bins)."""
    P = np.zeros((s, n), np.float32)
    for i in range(s):
        a = (i * n) // s
        b = -((-(i + 1) * n) // s)         # ceil((i+1)*n/s)
        P[i, a:b] = 1.0 / (b - a)
    return P


def _bilinear_upsample_matrix(n, s):
    """U[n, s]: bilinear upsample s -> n with align_corners=True (rows sum to 1)."""
    U = np.zeros((n, s), np.float32)
    for h in range(n):
        if s == 1:
            U[h, 0] = 1.0
            continue
        src = h * (s - 1) / (n - 1) if n > 1 else 0.0
        i0 = min(int(math.floor(src)), s - 1)
        i1 = min(i0 + 1, s - 1)
        f = src - i0
        U[h, i0] += 1.0 - f
        U[h, i1] += f
    return U


def _build_operators(H, W):
    """Build QT (HW,S2P): flat -> pooled, UU (S2P,HW): pooled -> flat, BMASK (4,S2P)."""
    nb = len(SIZES)
    HW = H * W
    q_blocks, u_blocks, spans = [], [], []
    for s in SIZES:
        Ph = _adaptive_pool_matrix(s, H)           # (s, H)
        Pw = _adaptive_pool_matrix(s, W)           # (s, W)
        Uh = _bilinear_upsample_matrix(H, s)       # (H, s)
        Uw = _bilinear_upsample_matrix(W, s)       # (W, s)
        # pooled[(i,j)] = sum_{h,w} Ph[i,h] Pw[j,w] z[h,w]
        q_blocks.append(np.einsum('ih,jw->ijhw', Ph, Pw).reshape(s * s, HW))
        # out[(h,w)]   = sum_{i,j} Uh[h,i] Uw[w,j] pooled[(i,j)]
        u_blocks.append(np.einsum('hi,wj->ijhw', Uh, Uw).reshape(s * s, HW))
        spans.append(s * s)
    S2 = sum(spans)                                # = 1 + 4 + 16 + 36 = 57
    S2P = -(-S2 // LANE) * LANE                    # pad rank axis to lane multiple
    Q = np.zeros((S2P, HW), np.float32)
    U = np.zeros((S2P, HW), np.float32)
    M = np.zeros((nb, S2P), np.float32)
    off = 0
    for k, (qb, ub, n) in enumerate(zip(q_blocks, u_blocks, spans)):
        Q[off:off + n] = qb
        U[off:off + n] = ub
        M[k, off:off + n] = 1.0
        off += n
    return np.ascontiguousarray(Q.T), U, M, S2P    # QT: (HW,S2P), UU: (S2P,HW)


def _pick_c_tile(C, max_tile=512):
    """Channel tile: full C if small, else a lane-aligned divisor <= max_tile."""
    if C <= max_tile:
        return C
    for t in range(max_tile, 0, -LANE):
        if t % LANE == 0 and C % t == 0:
            return t
    return C


# ---------------------------------------------------------------------------
# Pallas kernel.  grid = (batch, C_tiles); C_tiles is the inner reduction axis.
# ---------------------------------------------------------------------------
def _pyramid_kernel(x_ref, w_ref, qt_ref, uu_ref, mask_ref, b_ref, o_ref, z_acc):
    c = pl.program_id(1)

    @pl.when(c == 0)
    def _init():
        z_acc[...] = jnp.zeros_like(z_acc)

    # 1x1 conv for all 4 branches at once on the MXU: (4,Ct) @ (Ct,HW) -> (4,HW).
    z_acc[...] += jnp.dot(w_ref[...], x_ref[0],
                          preferred_element_type=jnp.float32)

    @pl.when(c == pl.num_programs(1) - 1)
    def _finalize():
        # pool (both axes, all branches) : (4,HW) @ (HW,S2P) -> (4,S2P)
        pooled = jnp.dot(z_acc[...], qt_ref[...],
                         preferred_element_type=jnp.float32)
        pooled = pooled * mask_ref[...]            # keep only own-branch entries
        # bilinear upsample back to full res: (4,S2P) @ (S2P,HW) -> (4,HW)
        y = jnp.dot(pooled, uu_ref[...],
                    preferred_element_type=jnp.float32)
        o_ref[0] = (y + b_ref[...]).astype(o_ref.dtype)   # lane-dense (4,HW) store


def pyramid_pooling(x, conv_w, conv_b):
    """x: (N, C, H, W) f32; conv_w: (4, C); conv_b: (4,) -> (N, 4, H, W)."""
    N, C, H, W = x.shape
    nb = len(SIZES)
    HW = H * W

    QT, UU, BMASK, S2P = _build_operators(H, W)

    x2 = x.reshape(N, C, HW)                       # free: NCHW is contiguous
    w = conv_w.astype(jnp.float32)                 # (4, C)
    b = conv_b.reshape(nb, 1).astype(jnp.float32)  # (4, 1)

    c_tile = _pick_c_tile(C)
    n_ct = C // c_tile

    flops = 2 * N * nb * C * HW + 4 * N * nb * S2P * HW
    bytes_accessed = 4 * (N * C * HW + N * nb * HW + nb * C
                          + 2 * HW * S2P + nb * S2P + nb)

    out = pl.pallas_call(
        _pyramid_kernel,
        out_shape=jax.ShapeDtypeStruct((N, nb, HW), jnp.float32),
        grid=(N, n_ct),
        in_specs=[
            pl.BlockSpec((1, c_tile, HW), lambda n, c: (n, c, 0)),   # x tile
            pl.BlockSpec((nb, c_tile), lambda n, c: (0, c)),         # conv weights
            pl.BlockSpec((HW, S2P), lambda n, c: (0, 0)),            # QT (resident)
            pl.BlockSpec((S2P, HW), lambda n, c: (0, 0)),            # UU (resident)
            pl.BlockSpec((nb, S2P), lambda n, c: (0, 0)),            # branch mask
            pl.BlockSpec((nb, 1), lambda n, c: (0, 0)),              # bias
        ],
        out_specs=pl.BlockSpec((1, nb, HW), lambda n, c: (n, 0, 0)),
        scratch_shapes=[pltpu.VMEM((nb, HW), jnp.float32)],          # z accumulator
        compiler_params=pltpu.CompilerParams(
            dimension_semantics=("parallel", "arbitrary")),
        cost_estimate=pl.CostEstimate(flops=flops, transcendentals=0,
                                      bytes_accessed=bytes_accessed),
    )(x2, w, jnp.asarray(QT), jnp.asarray(UU), jnp.asarray(BMASK), b)

    # TODO(synk): for throughput on v6e/v7x the three matmuls could take bf16
    # inputs (f32 accumulate); kept f32 here to preserve the 1e-4 tolerance.
    return out.reshape(N, nb, H, W)


# ---------------------------------------------------------------------------
# Independent numpy reference (explicit pooling bins + bilinear interp loops).
# ---------------------------------------------------------------------------
def _ref_adaptive_pool(x, s):
    N, C, H, W = x.shape
    out = np.zeros((N, C, s, s), np.float32)
    for i in range(s):
        h0, h1 = (i * H) // s, -((-(i + 1) * H) // s)
        for j in range(s):
            w0, w1 = (j * W) // s, -((-(j + 1) * W) // s)
            out[:, :, i, j] = x[:, :, h0:h1, w0:w1].mean(axis=(2, 3))
    return out


def _ref_bilinear_up(x, H, W):
    N, C, sh, sw = x.shape
    out = np.zeros((N, C, H, W), np.float32)
    for h in range(H):
        if sh == 1:
            i0, i1, fh = 0, 0, 0.0
        else:
            src = h * (sh - 1) / (H - 1)
            i0 = min(int(math.floor(src)), sh - 1)
            i1 = min(i0 + 1, sh - 1)
            fh = src - i0
        for w in range(W):
            if sw == 1:
                j0, j1, fw = 0, 0, 0.0
            else:
                src = w * (sw - 1) / (W - 1)
                j0 = min(int(math.floor(src)), sw - 1)
                j1 = min(j0 + 1, sw - 1)
                fw = src - j0
            out[:, :, h, w] = ((1 - fh) * (1 - fw) * x[:, :, i0, j0]
                               + (1 - fh) * fw * x[:, :, i0, j1]
                               + fh * (1 - fw) * x[:, :, i1, j0]
                               + fh * fw * x[:, :, i1, j1])
    return out


def _reference(x, conv_w, conv_b):
    xn = np.asarray(x, np.float32)
    feats = []
    for k, s in enumerate(SIZES):
        p = _ref_adaptive_pool(xn, s)
        conv = np.einsum('ncij,c->nij', p, np.asarray(conv_w[k])) + float(conv_b[k])
        feats.append(_ref_bilinear_up(conv[:, None], xn.shape[2], xn.shape[3]))
    return np.concatenate(feats, axis=1)


if __name__ == "__main__":
    N, C, H, W = 2, 4, 16, 16
    key = jax.random.PRNGKey(0)
    kx, kw, kb = jax.random.split(key, 3)
    x = jax.random.normal(kx, (N, C, H, W), jnp.float32)
    # deterministic synthetic conv1x1 params (4 branches, each C->1)
    conv_w = jax.random.normal(kw, (len(SIZES), C), jnp.float32) * 0.1
    conv_b = jax.random.normal(kb, (len(SIZES),), jnp.float32) * 0.1

    out = jax.block_until_ready(pyramid_pooling(x, conv_w, conv_b))

    ref = _reference(x, conv_w, conv_b)
    assert out.shape == (N, len(SIZES), H, W)
    assert np.allclose(np.asarray(out), ref, atol=1e-4, rtol=1e-4)
    print("KERNEL_OK")
</pallas_src>

<mosaic_0001>
module attributes {stable_mosaic.version = 11 : i64} {
  func.func @_pyramid_kernel(%arg0: i32, %arg1: i32, %arg2: memref<1x4x256xf32, #tpu.memory_space<vmem>>, %arg3: memref<4x4xf32, #tpu.memory_space<vmem>>, %arg4: memref<256x128xf32, #tpu.memory_space<vmem>>, %arg5: memref<128x256xf32, #tpu.memory_space<vmem>>, %arg6: memref<4x128xf32, #tpu.memory_space<vmem>>, %arg7: memref<4x1xf32, #tpu.memory_space<vmem>>, %arg8: memref<1x4x256xf32, #tpu.memory_space<vmem>>, %arg9: memref<4x256xf32, #tpu.memory_space<vmem>>) attributes {dimension_semantics = [#tpu.dimension_semantics<parallel>, #tpu.dimension_semantics<arbitrary>], iteration_bounds = array<i64: 2, 1>, scalar_prefetch = 0 : i64, scratch_operands = 1 : i64, tpu.core_type = #tpu.core_type<tc>, window_params = [{transform_indices = @transform_0, window_bounds = array<i64: 1, 4, 256>}, {transform_indices = @transform_1, window_bounds = array<i64: 4, 4>}, {pipeline_mode = #tpu.pipeline_mode<synchronous>, transform_indices = @transform_2, window_bounds = array<i64: 256, 128>}, {pipeline_mode = #tpu.pipeline_mode<synchronous>, transform_indices = @transform_3, window_bounds = array<i64: 128, 256>}, {pipeline_mode = #tpu.pipeline_mode<synchronous>, transform_indices = @transform_4, window_bounds = array<i64: 4, 128>}, {pipeline_mode = #tpu.pipeline_mode<synchronous>, transform_indices = @transform_5, window_bounds = array<i64: 4, 1>}, {transform_indices = @transform_6, window_bounds = array<i64: 1, 4, 256>}]} {
    %c0_i32 = arith.constant 0 : i32
    %0 = arith.cmpi eq, %arg1, %c0_i32 : i32
    %1 = arith.extui %0 : i1 to i32
    %c0_i32_0 = arith.constant 0 : i32
    %2 = arith.cmpi ne, %1, %c0_i32_0 : i32
    scf.if %2 {
      %cst_11 = arith.constant 0.000000e+00 : f32
      %13 = vector.broadcast %cst_11 : f32 to vector<4x256xf32>
      %c0_12 = arith.constant 0 : index
      %c0_13 = arith.constant 0 : index
      %14 = vector.load %arg9[%c0_12, %c0_13] : memref<4x256xf32, #tpu.memory_space<vmem>>, vector<4x256xf32>
      tpu.vector_store %arg9[%c0_12, %c0_13], %13 {strides = array<i32>} : memref<4x256xf32, #tpu.memory_space<vmem>>, vector<4x256xf32>,
    } else {
    }
    %c0 = arith.constant 0 : index
    %c0_1 = arith.constant 0 : index
    %3 = vector.load %arg9[%c0, %c0_1] : memref<4x256xf32, #tpu.memory_space<vmem>>, vector<4x256xf32>
    %c0_2 = arith.constant 0 : index
    %c0_3 = arith.constant 0 : index
    %4 = vector.load %arg3[%c0_2, %c0_3] : memref<4x4xf32, #tpu.memory_space<vmem>>, vector<4x4xf32>
    %c0_4 = arith.constant 0 : index
    %c0_5 = arith.constant 0 : index
    %c0_6 = arith.constant 0 : index
    %5 = vector.load %arg2[%c0_4, %c0_5, %c0_6] : memref<1x4x256xf32, #tpu.memory_space<vmem>>, vector<1x4x256xf32>
    %6 = vector.shape_cast %5 : vector<1x4x256xf32> to vector<4x256xf32>
    %cst = arith.constant dense<0.000000e+00> : vector<4x256xf32>
    %7 = tpu.matmul %4, %6, %cst {dimension_numbers = #tpu.dot_dimension_numbers<[1], [0], [0], [1], [0, 0, 1, 1], [], []>} : vector<4x4xf32>, vector<4x256xf32>, vector<4x256xf32> -> vector<4x256xf32>
    %8 = arith.addf %3, %7 : vector<4x256xf32>
    %c0_7 = arith.constant 0 : index
    %c0_8 = arith.constant 0 : index
    %9 = vector.load %arg9[%c0_7, %c0_8] : memref<4x256xf32, #tpu.memory_space<vmem>>, vector<4x256xf32>
    tpu.vector_store %arg9[%c0_7, %c0_8], %8 {strides = array<i32>} : memref<4x256xf32, #tpu.memory_space<vmem>>, vector<4x256xf32>,
    %c0_i32_9 = arith.constant 0 : i32
    %10 = arith.cmpi eq, %arg1, %c0_i32_9 : i32
    %11 = arith.extui %10 : i1 to i32
    %c0_i32_10 = arith.constant 0 : i32
    %12 = arith.cmpi ne, %11, %c0_i32_10 : i32
    scf.if %12 {
      %c0_11 = arith.constant 0 : index
      %c0_12 = arith.constant 0 : index
      %13 = vector.load %arg9[%c0_11, %c0_12] : memref<4x256xf32, #tpu.memory_space<vmem>>, vector<4x256xf32>
      %c0_13 = arith.constant 0 : index
      %c0_14 = arith.constant 0 : index
      %14 = vector.load %arg4[%c0_13, %c0_14] : memref<256x128xf32, #tpu.memory_space<vmem>>, vector<256x128xf32>
      %cst_15 = arith.constant dense<0.000000e+00> : vector<4x128xf32>
      %15 = tpu.matmul %13, %14, %cst_15 {dimension_numbers = #tpu.dot_dimension_numbers<[1], [0], [0], [1], [0, 0, 1, 1], [], []>} : vector<4x256xf32>, vector<256x128xf32>, vector<4x128xf32> -> vector<4x128xf32>
      %c0_16 = arith.constant 0 : index
      %c0_17 = arith.constant 0 : index
      %16 = vector.load %arg6[%c0_16, %c0_17] : memref<4x128xf32, #tpu.memory_space<vmem>>, vector<4x128xf32>
      %17 = arith.mulf %15, %16 : vector<4x128xf32>
      %c0_18 = arith.constant 0 : index
      %c0_19 = arith.constant 0 : index
      %18 = vector.load %arg5[%c0_18, %c0_19] : memref<128x256xf32, #tpu.memory_space<vmem>>, vector<128x256xf32>
      %cst_20 = arith.constant dense<0.000000e+00> : vector<4x256xf32>
      %19 = tpu.matmul %17, %18, %cst_20 {dimension_numbers = #tpu.dot_dimension_numbers<[1], [0], [0], [1], [0, 0, 1, 1], [], []>} : vector<4x128xf32>, vector<128x256xf32>, vector<4x256xf32> -> vector<4x256xf32>
      %c0_21 = arith.constant 0 : index
      %c0_22 = arith.constant 0 : index
      %20 = vector.load %arg7[%c0_21, %c0_22] : memref<4x1xf32, #tpu.memory_space<vmem>>, vector<4x1xf32>
      %21 = vector.broadcast %20 : vector<4x1xf32> to vector<4x256xf32>
      %22 = arith.addf %19, %21 : vector<4x256xf32>
      %c0_23 = arith.constant 0 : index
      %c0_24 = arith.constant 0 : index
      %c0_25 = arith.constant 0 : index
      %23 = vector.load %arg8[%c0_23, %c0_24, %c0_25] : memref<1x4x256xf32, #tpu.memory_space<vmem>>, vector<1x4x256xf32>
      %24 = vector.shape_cast %23 : vector<1x4x256xf32> to vector<4x256xf32>
      %25 = vector.shape_cast %22 : vector<4x256xf32> to vector<1x4x256xf32>
      tpu.vector_store %arg8[%c0_23, %c0_24, %c0_25], %25 {strides = array<i32>} : memref<1x4x256xf32, #tpu.memory_space<vmem>>, vector<1x4x256xf32>,
    } else {
    }
    return
  }
  func.func @transform_0(%arg0: i32, %arg1: i32) -> (i32, i32, i32) {
    %c0_i32 = arith.constant 0 : i32
    %c0_i32_0 = arith.constant 0 : i32
    return %arg0, %arg1, %c0_i32 : i32, i32, i32
  }
  func.func @transform_1(%arg0: i32, %arg1: i32) -> (i32, i32) {
    %c0_i32 = arith.constant 0 : i32
    %c0_i32_0 = arith.constant 0 : i32
    return %c0_i32, %arg1 : i32, i32
  }
  func.func @transform_2(%arg0: i32, %arg1: i32) -> (i32, i32) {
    %c0_i32 = arith.constant 0 : i32
    %c0_i32_0 = arith.constant 0 : i32
    %c0_i32_1 = arith.constant 0 : i32
    return %c0_i32, %c0_i32_0 : i32, i32
  }
  func.func @transform_3(%arg0: i32, %arg1: i32) -> (i32, i32) {
    %c0_i32 = arith.constant 0 : i32
    %c0_i32_0 = arith.constant 0 : i32
    %c0_i32_1 = arith.constant 0 : i32
    return %c0_i32, %c0_i32_0 : i32, i32
  }
  func.func @transform_4(%arg0: i32, %arg1: i32) -> (i32, i32) {
    %c0_i32 = arith.constant 0 : i32
    %c0_i32_0 = arith.constant 0 : i32
    %c0_i32_1 = arith.constant 0 : i32
    return %c0_i32, %c0_i32_0 : i32, i32
  }
  func.func @transform_5(%arg0: i32, %arg1: i32) -> (i32, i32) {
    %c0_i32 = arith.constant 0 : i32
    %c0_i32_0 = arith.constant 0 : i32
    %c0_i32_1 = arith.constant 0 : i32
    return %c0_i32, %c0_i32_0 : i32, i32
  }
  func.func @transform_6(%arg0: i32, %arg1: i32) -> (i32, i32, i32) {
    %c0_i32 = arith.constant 0 : i32
    %c0_i32_0 = arith.constant 0 : i32
    %c0_i32_1 = arith.constant 0 : i32
    return %arg0, %c0_i32, %c0_i32_0 : i32, i32, i32
  }
}

</mosaic_0001>

<llo_original>
// kernel: tpu_custom_call.1
$region0: #{tpu_custom_call.1}
  #allocation0 [shape = 'u32[]', space=smem, size = 0x4, offset = 0x4, fixed_abs, tag = 'smem constant byte address 0x4 - core index']
  #allocation1 [shape = 'u32[144,128]{1,0:T(1,128)}', space=vmem, size = 0x12000, scoped, tag = 'internal scratch']
  #allocation2 [shape = 'f32[4,256]{1,0:T(4,128)}', space=vmem, size = 0x1000, scoped, tag = 'scratch operand']
  %s0 = inlined_call_operand.hbm [shape: f32[2,4,256], index: 0, kind: input, shape index: {}]
  %s1 = inlined_call_operand.vmem [shape: f32[4,4], index: 1, kind: input, shape index: {}]
  %s2 = inlined_call_operand.hbm [shape: f32[256,128], index: 2, kind: input, shape index: {}]
  %s3 = inlined_call_operand.hbm [shape: f32[128,256], index: 3, kind: input, shape index: {}]
  %s4 = inlined_call_operand.vmem [shape: f32[4,128], index: 4, kind: input, shape index: {}]
  %s5 = inlined_call_operand.vmem [shape: f32[4,1], index: 5, kind: input, shape index: {}]
  %s6 = inlined_call_operand.hbm [shape: f32[2,4,256], index: 6, kind: output, shape index: {}]
  %s7 = sld [smem:[#allocation0]]
  $region77: #{tpu_custom_call.1} parent=0
    _
  %s9 = ssub.s32 1, %s7
  %s10 = scalar_select 0, %s9, %s7
  $region1: #{tpu_custom_call.1} parent=0
    #allocation3 [shape = 'u8[8192]{0}', space=vmem, size = 0x2000, scoped, tag = 'input window, operand 0']
    #allocation4 [shape = 's32[2]{0}', space=sflag, size = 0x8, scoped, tag = 'scoped memory for tpu_custom_call.1']
    #allocation5 [shape = 's32[2]{0}', space=sflag, size = 0x8, scoped, tag = 'scoped memory for tpu_custom_call.1']
    #allocation6 [shape = 'u8[131072]{0}', space=vmem, size = 0x20000, scoped, tag = 'input window, operand 2, single buffered']
    #allocation7 [shape = 's32[1]{0}', space=sflag, size = 0x4, scoped, tag = 'scoped memory for tpu_custom_call.1']
    #allocation8 [shape = 'u8[131072]{0}', space=vmem, size = 0x20000, scoped, tag = 'input window, operand 3, single buffered']
    #allocation9 [shape = 'u8[8192]{0}', space=vmem, size = 0x2000, scoped, tag = 'output window, operand 0']
    %11 = vsyncpa [#allocation4], 0
    %s12 = scalar_lea.sflag [#allocation4], 1
    %13 = vsyncpa %s12, 0
    %14 = vsyncpa [#allocation7], 0
    %15 = vsyncpa [#allocation5], 0
    %s16 = scalar_lea.sflag [#allocation5], 1
    %17 = vsyncpa %s16, 0
    loop: start=0, step=1, limit=4
    $region2: #{tpu_custom_call.1} parent=1 // loop_pre_header
      _
    $region3: #{tpu_custom_call.1} parent=1 // loop_header
      %s19 = sphi 0, %s23
      %p20 = scmp.ge.s32.totalorder %s19, 4
      %s26 = sphi 0, %s38
      %s27 = sphi 0, %s34
      %s28 = sphi 0, %s26
      %s29 = sphi 0, %s27
      %s30 = sphi 0, %s28
      %s31 = sphi 0, %s29
      %s43 = sphi 0, %s45
      %s46 = sphi 0, %s43
      %s47 = sphi 0, %s46
      %s63 = sphi 0, %s47
      %s69 = sphi 0, %s71
      %s72 = sphi 0, %s69
      %s73 = sphi 0, %s72
      %s89 = sphi 0, %s73
      %s93 = sphi 0, %s93
      %s95 = sphi 0, %s93
      %s96 = sphi 0, %s95
      %s110 = sphi 0, %s96
      %s114 = sphi 0, %s114
      %s116 = sphi 0, %s114
      %s117 = sphi 0, %s116
      %s131 = sphi 0, %s117
      %s135 = sphi 0, %s135
      %s137 = sphi 0, %s135
      %s138 = sphi 0, %s137
      %s152 = sphi 0, %s138
      %s156 = sphi 0, %s156
      %s158 = sphi 0, %s156
      %s159 = sphi 0, %s158
      %s173 = sphi 0, %s159
      %s179 = sphi 0, %s181
      %s182 = sphi 0, %s179
      %s183 = sphi 0, %s182
      %s199 = sphi 0, %s183
    $region4: #{tpu_custom_call.1} parent=1 // loop_header_branch
      %22 = sbr.rel (%p20) target = $region8
    $region5: #{tpu_custom_call.1} parent=1 // loop_body
      %s24 = ssub.s32 %s19, 1
      %s25 = ssub.s32 %s19, 2
      %s32 = sadd.s32 1, %s27
      %p33 = scmp.ge.s32.totalorder %s32, 1
      %s34 = scalar_select %p33, 0, %s32
      %s35 = sadd.s32 1, %s26
      %s36 = scalar_select %p33, %s35, %s26
      %p37 = scmp.ge.s32.totalorder %s36, 2
      %s38 = scalar_select %p37, 0, %s36
      %s39 = ssub.s32 %s26, %s38
      %s40 = ssub.s32 %s27, %s34
      %s41 = sor.u32 %s39, %s40
      %p42 = scmp.eq.s32.totalorder %s41, 0
      %s44 = sadd.s32 %s43, 1
      %s45 = scalar_select %p42, %s43, %s44
      %p48 = pneg %p42
      %p49 = scmp.eq.s32.totalorder %s19, 1
      %p50 = por %p48, %p49
      %p51 = scmp.ne.s32.totalorder %s43, %s46
      %p52 = scmp.eq.s32.totalorder %s19, 0
      %p53 = por %p51, %p52
      %p54 = scmp.ne.s32.totalorder %s43, %s46
      %p55 = scmp.eq.s32.totalorder %s24, 1
      %p56 = por %p54, %p55
      %p57 = scmp.ne.s32.totalorder %s46, %s47
      %p58 = scmp.eq.s32.totalorder %s24, 0
      %p59 = por %p57, %p58
      %p60 = scmp.ne.s32.totalorder %s46, %s47
      %p61 = scmp.eq.s32.totalorder %s25, 1
      %p62 = por %p60, %p61
      %p64 = scmp.ne.s32.totalorder %s47, %s63
      %p65 = scmp.eq.s32.totalorder %s25, 0
      %p66 = por %p64, %p65
      %s67 = ssub.s32 %s27, %s34
      %p68 = scmp.eq.s32.totalorder %s67, 0
      %s70 = sadd.s32 %s69, 1
      %s71 = scalar_select %p68, %s69, %s70
      %p74 = pneg %p68
      %p75 = scmp.eq.s32.totalorder %s19, 1
      %p76 = por %p74, %p75
      %p77 = scmp.ne.s32.totalorder %s69, %s72
      %p78 = scmp.eq.s32.totalorder %s19, 0
      %p79 = por %p77, %p78
      %p80 = scmp.ne.s32.totalorder %s69, %s72
      %p81 = scmp.eq.s32.totalorder %s24, 1
      %p82 = por %p80, %p81
      %p83 = scmp.ne.s32.totalorder %s72, %s73
      %p84 = scmp.eq.s32.totalorder %s24, 0
      %p85 = por %p83, %p84
      %p86 = scmp.ne.s32.totalorder %s72, %s73
      %p87 = scmp.eq.s32.totalorder %s25, 1
      %p88 = por %p86, %p87
      %p90 = scmp.ne.s32.totalorder %s73, %s89
      %p91 = scmp.eq.s32.totalorder %s25, 0
      %p92 = por %p90, %p91
      %s94 = sadd.s32 %s93, 1
      %p97 = scmp.eq.s32.totalorder %s19, 1
      %p98 = scmp.ne.s32.totalorder %s93, %s95
      %p99 = scmp.eq.s32.totalorder %s19, 0
      %p100 = por %p98, %p99
      %p101 = scmp.ne.s32.totalorder %s93, %s95
      %p102 = scmp.eq.s32.totalorder %s24, 1
      %p103 = por %p101, %p102
      %p104 = scmp.ne.s32.totalorder %s95, %s96
      %p105 = scmp.eq.s32.totalorder %s24, 0
      %p106 = por %p104, %p105
      %p107 = scmp.ne.s32.totalorder %s95, %s96
      %p108 = scmp.eq.s32.totalorder %s25, 1
      %p109 = por %p107, %p108
      %p111 = scmp.ne.s32.totalorder %s96, %s110
      %p112 = scmp.eq.s32.totalorder %s25, 0
      %p113 = por %p111, %p112
      %s115 = sadd.s32 %s114, 1
      %p118 = scmp.eq.s32.totalorder %s19, 1
      %p119 = scmp.ne.s32.totalorder %s114, %s116
      %p120 = scmp.eq.s32.totalorder %s19, 0
      %p121 = por %p119, %p120
      %p122 = scmp.ne.s32.totalorder %s114, %s116
      %p123 = scmp.eq.s32.totalorder %s24, 1
      %p124 = por %p122, %p123
      %p125 = scmp.ne.s32.totalorder %s116, %s117
      %p126 = scmp.eq.s32.totalorder %s24, 0
      %p127 = por %p125, %p126
      %p128 = scmp.ne.s32.totalorder %s116, %s117
      %p129 = scmp.eq.s32.totalorder %s25, 1
      %p130 = por %p128, %p129
      %p132 = scmp.ne.s32.totalorder %s117, %s131
      %p133 = scmp.eq.s32.totalorder %s25, 0
      %p134 = por %p132, %p133
      %s136 = sadd.s32 %s135, 1
      %p139 = scmp.eq.s32.totalorder %s19, 1
      %p140 = scmp.ne.s32.totalorder %s135, %s137
      %p141 = scmp.eq.s32.totalorder %s19, 0
      %p142 = por %p140, %p141
      %p143 = scmp.ne.s32.totalorder %s135, %s137
      %p144 = scmp.eq.s32.totalorder %s24, 1
      %p145 = por %p143, %p144
      %p146 = scmp.ne.s32.totalorder %s137, %s138
      %p147 = scmp.eq.s32.totalorder %s24, 0
      %p148 = por %p146, %p147
      %p149 = scmp.ne.s32.totalorder %s137, %s138
      %p150 = scmp.eq.s32.totalorder %s25, 1
      %p151 = por %p149, %p150
      %p153 = scmp.ne.s32.totalorder %s138, %s152
      %p154 = scmp.eq.s32.totalorder %s25, 0
      %p155 = por %p153, %p154
      %s157 = sadd.s32 %s156, 1
      %p160 = scmp.eq.s32.totalorder %s19, 1
      %p161 = scmp.ne.s32.totalorder %s156, %s158
      %p162 = scmp.eq.s32.totalorder %s19, 0
      %p163 = por %p161, %p162
      %p164 = scmp.ne.s32.totalorder %s156, %s158
      %p165 = scmp.eq.s32.totalorder %s24, 1
      %p166 = por %p164, %p165
      %p167 = scmp.ne.s32.totalorder %s158, %s159
      %p168 = scmp.eq.s32.totalorder %s24, 0
      %p169 = por %p167, %p168
      %p170 = scmp.ne.s32.totalorder %s158, %s159
      %p171 = scmp.eq.s32.totalorder %s25, 1
      %p172 = por %p170, %p171
      %p174 = scmp.ne.s32.totalorder %s159, %s173
      %p175 = scmp.eq.s32.totalorder %s25, 0
      %p176 = por %p174, %p175
      %s177 = ssub.s32 %s26, %s38
      %p178 = scmp.eq.s32.totalorder %s177, 0
      %s180 = sadd.s32 %s179, 1
      %s181 = scalar_select %p178, %s179, %s180
      %p184 = pneg %p178
      %p185 = scmp.eq.s32.totalorder %s19, 1
      %p186 = por %p184, %p185
      %p187 = scmp.ne.s32.totalorder %s179, %s182
      %p188 = scmp.eq.s32.totalorder %s19, 0
      %p189 = por %p187, %p188
      %p190 = scmp.ne.s32.totalorder %s179, %s182
      %p191 = scmp.eq.s32.totalorder %s24, 1
      %p192 = por %p190, %p191
      %p193 = scmp.ne.s32.totalorder %s182, %s183
      %p194 = scmp.eq.s32.totalorder %s24, 0
      %p195 = por %p193, %p194
      %p196 = scmp.ne.s32.totalorder %s182, %s183
      %p197 = scmp.eq.s32.totalorder %s25, 1
      %p198 = por %p196, %p197
      %p200 = scmp.ne.s32.totalorder %s183, %s199
      %p201 = scmp.eq.s32.totalorder %s25, 0
      %p202 = por %p200, %p201
      %p203 = scmp.le.s32.totalorder 1, %s19
      %p204 = scmp.lt.s32.totalorder %s19, 3
      %p205 = pnand %p203, %p204
      %p206 = pneg %p205
      // Predicated region
      $region9: #{tpu_custom_call.1} parent=5 // pred_check
        _
      $region10: #{tpu_custom_call.1} parent=5 // pred_check_branch
        %208 = sbr.rel (%p205) target = $region12
      $region11: #{tpu_custom_call.1} parent=5 // pred_region
        %s209 = ssub.s32 %s19, 1
        // Predicated region
        $region13: #{tpu_custom_call.1} parent=11 // pred_check
          %p210 = pneg %p85
        $region14: #{tpu_custom_call.1} parent=11 // pred_check_branch
          %212 = sbr.rel (%p210) target = $region16
        $region15: #{tpu_custom_call.1} parent=11 // pred_region
          %p213 = scmp.lt.s32.totalorder %s29, 0
          %s214 = scalar_select %p213, %s29, 0
          %s215 = smul.addr %s214, 4
          %s216 = scalar_lea.vmem %s1, %s215
        $region16: #{tpu_custom_call.1} parent=11 // pred_fallthru
          _
        // Predicated region
        $region17: #{tpu_custom_call.1} parent=11 // pred_check
          %p217 = pneg %p106
        $region18: #{tpu_custom_call.1} parent=11 // pred_check_branch
          %219 = sbr.rel (%p217) target = $region20
        $region19: #{tpu_custom_call.1} parent=11 // pred_region
          %s221 = ssub.s32 4096, 4096
          %222 = vsyncadd [#allocation7], %s221
          %s223 = sshll.u32 [#allocation6], 4
          %s224 = int_to_ptr.vmem [resolvable:$true] %s223
          %229 = dma.hbm_to_vmem [thread:$0]  %s2, 4096, %s224, [#allocation7], 128, 128, 8
        $region20: #{tpu_custom_call.1} parent=11 // pred_fallthru
          _
        // Predicated region
        $region21: #{tpu_custom_call.1} parent=11 // pred_check
          %p230 = pneg %p127
        $region22: #{tpu_custom_call.1} parent=11 // pred_check_branch
          %232 = sbr.rel (%p230) target = $region24
        $region23: #{tpu_custom_call.1} parent=11 // pred_region
          %s234 = ssub.s32 4096, 4096
          %235 = vsyncadd [#allocation7], %s234
          %s236 = sshll.u32 [#allocation8], 4
          %s237 = int_to_ptr.vmem [resolvable:$true] %s236
          %242 = dma.hbm_to_vmem [thread:$0]  %s3, 4096, %s237, [#allocation7], 256, 256, 16
        $region24: #{tpu_custom_call.1} parent=11 // pred_fallthru
          _
        // Predicated region
        $region25: #{tpu_custom_call.1} parent=11 // pred_check
          %p243 = pneg %p148
        $region26: #{tpu_custom_call.1} parent=11 // pred_check_branch
          %245 = sbr.rel (%p243) target = $region28
        $region27: #{tpu_custom_call.1} parent=11 // pred_region
          _
        $region28: #{tpu_custom_call.1} parent=11 // pred_fallthru
          _
        // Predicated region
        $region29: #{tpu_custom_call.1} parent=11 // pred_check
          %p246 = pneg %p169
        $region30: #{tpu_custom_call.1} parent=11 // pred_check_branch
          %248 = sbr.rel (%p246) target = $region32
        $region31: #{tpu_custom_call.1} parent=11 // pred_region
          _
        $region32: #{tpu_custom_call.1} parent=11 // pred_fallthru
          _
      $region12: #{tpu_custom_call.1} parent=5 // pred_fallthru
        _
      %p249 = scmp.lt.s32.totalorder %s19, 2
      // Predicated region
      $region33: #{tpu_custom_call.1} parent=5 // pred_check
        %p250 = pneg %p249
      $region34: #{tpu_custom_call.1} parent=5 // pred_check_branch
        %252 = sbr.rel (%p250) target = $region36
      $region35: #{tpu_custom_call.1} parent=5 // pred_region
        // Predicated region
        $region37: #{tpu_custom_call.1} parent=35 // pred_check
          %p253 = pneg %p53
        $region38: #{tpu_custom_call.1} parent=35 // pred_check_branch
          %255 = sbr.rel (%p253) target = $region40
        $region39: #{tpu_custom_call.1} parent=35 // pred_region
          %s256 = sand.u32 %s43, 1
          %s257 = scalar_lea.sflag [#allocation4], %s256
          %s258 = sand.u32 %s43, 1
          %s259 = smul.addr %s258, 8
          %s260 = scalar_lea.vmem [#allocation3], %s259
          %s262 = ssub.s32 128, 128
          %263 = vsyncadd %s257, %s262
          %s264 = smul.addr %s27, 2
          %s265 = smul.addr %s26, 2
          %s266 = sadd.s32 %s264, %s265
          %s267 = smul.addr %s266, 64
          %s268 = scalar_lea.hbm %s0, %s267
          %s270 = sshll.u32 %s260, 4
          %s271 = int_to_ptr.vmem [resolvable:$true] %s270
          %273 = dma.hbm_to_vmem [thread:$0]  %s268, 128, %s271, %s257
        $region40: #{tpu_custom_call.1} parent=35 // pred_fallthru
          _
      $region36: #{tpu_custom_call.1} parent=5 // pred_fallthru
        _
      %p274 = scmp.le.s32.totalorder 1, %s19
      %p275 = scmp.lt.s32.totalorder %s19, 3
      %p276 = pnand %p274, %p275
      %p277 = pneg %p276
      // Predicated region
      $region41: #{tpu_custom_call.1} parent=5 // pred_check
        _
      $region42: #{tpu_custom_call.1} parent=5 // pred_check_branch
        %279 = sbr.rel (%p276) target = $region44
      $region43: #{tpu_custom_call.1} parent=5 // pred_region
        %s280 = ssub.s32 %s19, 1
        %s281 = sand.u32 %s46, 1
        %s282 = scalar_lea.sflag [#allocation4], %s281
        %s283 = sand.u32 %s46, 1
        %s284 = smul.addr %s283, 8
        %s285 = scalar_lea.vmem [#allocation3], %s284
        // Predicated region
        $region45: #{tpu_custom_call.1} parent=43 // pred_check
          %p286 = pneg %p59
        $region46: #{tpu_custom_call.1} parent=43 // pred_check_branch
          %288 = sbr.rel (%p286) target = $region48
        $region47: #{tpu_custom_call.1} parent=43 // pred_region
          %289 = dma.done %s282, 128
        $region48: #{tpu_custom_call.1} parent=43 // pred_fallthru
          _
        // Predicated region
        $region49: #{tpu_custom_call.1} parent=43 // pred_check
          %p290 = pneg %p106
        $region50: #{tpu_custom_call.1} parent=43 // pred_check_branch
          %292 = sbr.rel (%p290) target = $region52
        $region51: #{tpu_custom_call.1} parent=43 // pred_region
          %293 = dma.done [#allocation7], 4096
        $region52: #{tpu_custom_call.1} parent=43 // pred_fallthru
          _
        // Predicated region
        $region53: #{tpu_custom_call.1} parent=43 // pred_check
          %p294 = pneg %p127
        $region54: #{tpu_custom_call.1} parent=43 // pred_check_branch
          %296 = sbr.rel (%p294) target = $region56
        $region55: #{tpu_custom_call.1} parent=43 // pred_region
          %297 = dma.done [#allocation7], 4096
        $region56: #{tpu_custom_call.1} parent=43 // pred_fallthru
          _
        %s298 = sand.u32 %s46, 1
        %s299 = scalar_lea.sflag [#allocation4], %s298
        %s300 = sand.u32 %s46, 1
        %s301 = smul.addr %s300, 8
        %s302 = scalar_lea.vmem [#allocation3], %s301
        %p303 = pneg %p59
        %p304 = pneg %p56
        %p305 = scmp.lt.s32.totalorder %s29, 0
        %s306 = scalar_select %p305, %s29, 0
        %s307 = smul.addr %s306, 4
        %s308 = scalar_lea.vmem %s1, %s307
        %p309 = pneg %p85
        %p310 = pneg %p82
        %p311 = pneg %p106
        %p312 = pneg %p103
        %p313 = pneg %p127
        %p314 = pneg %p124
        %p315 = pneg %p148
        %p316 = pneg %p145
        %p317 = pneg %p169
        %p318 = pneg %p166
        %p319 = pneg %p195
        %p320 = pneg %p192
        %s321 = sand.u32 %s182, 1
        %s322 = scalar_lea.sflag [#allocation5], %s321
        %s323 = sand.u32 %s182, 1
        %s324 = smul.addr %s323, 8
        %s325 = scalar_lea.vmem [#allocation9], %s324
        %p326 = scmp.lt.s32.totalorder %s29, 0
        %s327 = scalar_select %p326, %s29, 0
        %s328 = smul.addr %s327, 4
        %s329 = scalar_lea.vmem %s1, %s328
        %p330 = scmp.eq.s32.totalorder %s29, 0
        // Predicated region
        $region57: #{tpu_custom_call.1} parent=43 // pred_check
          %p331 = pneg %p330
        $region58: #{tpu_custom_call.1} parent=43 // pred_check_branch
          %333 = sbr.rel (%p331) target = $region60
        $region59: #{tpu_custom_call.1} parent=43 // pred_region
          %334 = vst [vmem:[#allocation2] sm:$0xff] 0.0
        $region60: #{tpu_custom_call.1} parent=43 // pred_fallthru
          _
        %v335 = vld [vmem:[#allocation2] sm:$0xff]
        %v336 = vld [vmem:[%s329] sm:$0xf]
        %v337 = vld [vmem:[%s285] sm:$0xff]
        %v339 = vcombine.high %v337, %v337
        %vm340 = vcmask 31744
        %v342 = vsel %vm340, %v336, 0
        %vm344 = vcmask 1043456
        %v345 = vsel %vm344, %v337, 0
        %v347 = vsel %vm344, %v339, 0
        %349 = vmatprep.subr.mxu0 %v347
        %350 = vmatpush1.msra.mxu0 %v345
        %351 = vmatprep.subr.mxu0 0.0
        %352 = vmatpush1.msra.mxu0 0.0
        %353 = vmatprep.subr.mxu0 0.0
        %354 = vmatpush1.msra.mxu0 0.0
        %355 = vmatprep.subr.mxu0 0.0
        %356 = vmatpush1.msra.mxu0 0.0
        %357 = vmatprep.subr.mxu0 0.0
        %358 = vmatpush1.msra.mxu0 0.0
        %359 = vmatprep.subr.mxu0 0.0
        %360 = vmatpush1.msra.mxu0 0.0
        %361 = vmatprep.subr.mxu0 0.0
        %362 = vmatpush1.msra.mxu0 0.0
        %363 = vmatprep.subr.mxu0 0.0
        %364 = vmatpush1.msra.mxu0 0.0
        %365 = vmatprep.subr.mxu0 0.0
        %366 = vmatpush1.msra.mxu0 0.0
        %367 = vmatprep.subr.mxu0 0.0
        %368 = vmatpush1.msra.mxu0 0.0
        %369 = vmatprep.subr.mxu0 0.0
        %370 = vmatpush1.msra.mxu0 0.0
        %371 = vmatprep.subr.mxu0 0.0
        %372 = vmatpush1.msra.mxu0 0.0
        %373 = vmatprep.subr.mxu0 0.0
        %374 = vmatpush1.msra.mxu0 0.0
        %375 = vmatprep.subr.mxu0 0.0
        %376 = vmatpush1.msra.mxu0 0.0
        %377 = vmatprep.subr.mxu0 0.0
        %378 = vmatpush1.msra.mxu0 0.0
        %379 = vmatprep.subr.mxu0 0.0
        %380 = vmatpush1.msra.mxu0 0.0
        %381 = vmatprep.subr.mxu0 0.0
        %382 = vmatpush1.msra.mxu0 0.0
        %383 = vmatprep.subr.mxu0 0.0
        %384 = vmatpush1.msra.mxu0 0.0
        %385 = vmatprep.subr.mxu0 0.0
        %386 = vmatpush1.msra.mxu0 0.0
        %387 = vmatprep.subr.mxu0 0.0
        %388 = vmatpush1.msra.mxu0 0.0
        %389 = vmatprep.subr.mxu0 0.0
        %390 = vmatpush1.msra.mxu0 0.0
        %391 = vmatprep.subr.mxu0 0.0
        %392 = vmatpush1.msra.mxu0 0.0
        %393 = vmatprep.subr.mxu0 0.0
        %394 = vmatpush1.msra.mxu0 0.0
        %395 = vmatprep.subr.mxu0 0.0
        %396 = vmatpush1.msra.mxu0 0.0
        %397 = vmatprep.subr.mxu0 0.0
        %398 = vmatpush1.msra.mxu0 0.0
        %399 = vmatprep.subr.mxu0 0.0
        %400 = vmatpush1.msra.mxu0 0.0
        %401 = vmatprep.subr.mxu0 0.0
        %402 = vmatpush1.msra.mxu0 0.0
        %403 = vmatprep.subr.mxu0 0.0
        %404 = vmatpush1.msra.mxu0 0.0
        %405 = vmatprep.subr.mxu0 0.0
        %406 = vmatpush1.msra.mxu0 0.0
        %407 = vmatprep.subr.mxu0 0.0
        %408 = vmatpush1.msra.mxu0 0.0
        %409 = vmatprep.subr.mxu0 0.0
        %410 = vmatpush1.msra.mxu0 0.0
        %411 = vmatprep.subr.mxu0 0.0
        %412 = vmatpush1.msra.mxu0 0.0
        %413 = vmatprep.mubr.f32.mxu0 0.0
        %414 = vmatmul.mubr.f32.gmra.mrb[0].mxu0 %v342
        %v415 = vpop.f32.mrb[0].mxu0
        %v416 = vadd.f32 0.0, %v415
        %v417 = vpop.f32.mrb[0].mxu0
        %v418 = vadd.f32 0.0, %v417
        %419 = vdwg.mxu0
        %v422 = vcombine.low %v416, %v418
        %v424 = vadd.f32 %v335, %v422
        %425 = vst [vmem:[#allocation2] sm:$0xff] %v424
        // Predicated region
        $region61: #{tpu_custom_call.1} parent=43 // pred_check
          %p426 = pneg %p330
        $region62: #{tpu_custom_call.1} parent=43 // pred_check_branch
          %428 = sbr.rel (%p426) target = $region64
        $region63: #{tpu_custom_call.1} parent=43 // pred_region
          %v429 = vld [vmem:[#allocation2] sm:$0xff]
          %v430 = vld [vmem:[#allocation6] sm:$0xff]
          %v431 = vld [vmem:[#allocation6 + $0x8] sm:$0xff]
          %v432 = vld [vmem:[#allocation6 + $0x10] sm:$0xff]
          %v433 = vld [vmem:[#allocation6 + $0x18] sm:$0xff]
          %v434 = vld [vmem:[#allocation6 + $0x20] sm:$0xff]
          %v435 = vld [vmem:[#allocation6 + $0x28] sm:$0xff]
          %v436 = vld [vmem:[#allocation6 + $0x30] sm:$0xff]
          %v437 = vld [vmem:[#allocation6 + $0x38] sm:$0xff]
          %v438 = vld [vmem:[#allocation6 + $0x40] sm:$0xff]
          %v439 = vld [vmem:[#allocation6 + $0x48] sm:$0xff]
          %v440 = vld [vmem:[#allocation6 + $0x50] sm:$0xff]
          %v441 = vld [vmem:[#allocation6 + $0x58] sm:$0xff]
          %v442 = vld [vmem:[#allocation6 + $0x60] sm:$0xff]
          %v443 = vld [vmem:[#allocation6 + $0x68] sm:$0xff]
          %v444 = vld [vmem:[#allocation6 + $0x70] sm:$0xff]
          %v445 = vld [vmem:[#allocation6 + $0x78] sm:$0xff]
          %v446 = vld [vmem:[#allocation6 + $0x80] sm:$0xff]
          %v447 = vld [vmem:[#allocation6 + $0x88] sm:$0xff]
          %v448 = vld [vmem:[#allocation6 + $0x90] sm:$0xff]
          %v449 = vld [vmem:[#allocation6 + $0x98] sm:$0xff]
          %v450 = vld [vmem:[#allocation6 + $0xa0] sm:$0xff]
          %v451 = vld [vmem:[#allocation6 + $0xa8] sm:$0xff]
          %v452 = vld [vmem:[#allocation6 + $0xb0] sm:$0xff]
          %v453 = vld [vmem:[#allocation6 + $0xb8] sm:$0xff]
          %v454 = vld [vmem:[#allocation6 + $0xc0] sm:$0xff]
          %v455 = vld [vmem:[#allocation6 + $0xc8] sm:$0xff]
          %v456 = vld [vmem:[#allocation6 + $0xd0] sm:$0xff]
          %v457 = vld [vmem:[#allocation6 + $0xd8] sm:$0xff]
          %v458 = vld [vmem:[#allocation6 + $0xe0] sm:$0xff]
          %v459 = vld [vmem:[#allocation6 + $0xe8] sm:$0xff]
          %v460 = vld [vmem:[#allocation6 + $0xf0] sm:$0xff]
          %v461 = vld [vmem:[#allocation6 + $0xf8] sm:$0xff]
          %v463 = vcombine.high %v429, %v429
          %465 = vmatprep.subr.mxu0 0.0
          %466 = vmatpush1.msra.mxu0 %v430
          %467 = vmatprep.subr.mxu0 0.0
          %468 = vmatpush1.msra.mxu0 %v431
          %469 = vmatprep.subr.mxu0 0.0
          %470 = vmatpush1.msra.mxu0 %v432
          %471 = vmatprep.subr.mxu0 0.0
          %472 = vmatpush1.msra.mxu0 %v433
          %473 = vmatprep.subr.mxu0 0.0
          %474 = vmatpush1.msra.mxu0 %v434
          %475 = vmatprep.subr.mxu0 0.0
          %476 = vmatpush1.msra.mxu0 %v435
          %477 = vmatprep.subr.mxu0 0.0
          %478 = vmatpush1.msra.mxu0 %v436
          %479 = vmatprep.subr.mxu0 0.0
          %480 = vmatpush1.msra.mxu0 %v437
          %481 = vmatprep.subr.mxu0 0.0
          %482 = vmatpush1.msra.mxu0 %v438
          %483 = vmatprep.subr.mxu0 0.0
          %484 = vmatpush1.msra.mxu0 %v439
          %485 = vmatprep.subr.mxu0 0.0
          %486 = vmatpush1.msra.mxu0 %v440
          %487 = vmatprep.subr.mxu0 0.0
          %488 = vmatpush1.msra.mxu0 %v441
          %489 = vmatprep.subr.mxu0 0.0
          %490 = vmatpush1.msra.mxu0 %v442
          %491 = vmatprep.subr.mxu0 0.0
          %492 = vmatpush1.msra.mxu0 %v443
          %493 = vmatprep.subr.mxu0 0.0
          %494 = vmatpush1.msra.mxu0 %v444
          %495 = vmatprep.subr.mxu0 0.0
          %496 = vmatpush1.msra.mxu0 %v445
          %497 = vmatprep.subr.mxu0 0.0
          %498 = vmatpush1.msra.mxu0 %v446
          %499 = vmatprep.subr.mxu0 0.0
          %500 = vmatpush1.msra.mxu0 %v447
          %501 = vmatprep.subr.mxu0 0.0
          %502 = vmatpush1.msra.mxu0 %v448
          %503 = vmatprep.subr.mxu0 0.0
          %504 = vmatpush1.msra.mxu0 %v449
          %505 = vmatprep.subr.mxu0 0.0
          %506 = vmatpush1.msra.mxu0 %v450
          %507 = vmatprep.subr.mxu0 0.0
          %508 = vmatpush1.msra.mxu0 %v451
          %509 = vmatprep.subr.mxu0 0.0
          %510 = vmatpush1.msra.mxu0 %v452
          %511 = vmatprep.subr.mxu0 0.0
          %512 = vmatpush1.msra.mxu0 %v453
          %513 = vmatprep.subr.mxu0 0.0
          %514 = vmatpush1.msra.mxu0 %v454
          %515 = vmatprep.subr.mxu0 0.0
          %516 = vmatpush1.msra.mxu0 %v455
          %517 = vmatprep.subr.mxu0 0.0
          %518 = vmatpush1.msra.mxu0 %v456
          %519 = vmatprep.subr.mxu0 0.0
          %520 = vmatpush1.msra.mxu0 %v457
          %521 = vmatprep.subr.mxu0 0.0
          %522 = vmatpush1.msra.mxu0 %v458
          %523 = vmatprep.subr.mxu0 0.0
          %524 = vmatpush1.msra.mxu0 %v459
          %525 = vmatprep.subr.mxu0 0.0
          %526 = vmatpush1.msra.mxu0 %v460
          %527 = vmatprep.subr.mxu0 0.0
          %528 = vmatpush1.msra.mxu0 %v461
          %529 = vmatprep.mubr.f32.mxu0 %v463
          %530 = vmatmul.mubr.f32.gmra.mrb[0].mxu0 %v429
          %v531 = vpop.f32.mrb[0].mxu0
          %v532 = vadd.f32 0.0, %v531
          %v533 = vpop.f32.mrb[0].mxu0
          %534 = vdwg.mxu0
          %v535 = vld [vmem:[%s4] sm:$0xf]
          %v536 = vmul.f32 %v532, %v535
          %v537 = vld [vmem:[#allocation8] sm:$0xff]
          %v538 = vld [vmem:[#allocation8 + $0x8] sm:$0xff]
          %v539 = vld [vmem:[#allocation8 + $0x10] sm:$0xff]
          %v540 = vld [vmem:[#allocation8 + $0x18] sm:$0xff]
          %v541 = vld [vmem:[#allocation8 + $0x20] sm:$0xff]
          %v542 = vld [vmem:[#allocation8 + $0x28] sm:$0xff]
          %v543 = vld [vmem:[#allocation8 + $0x30] sm:$0xff]
          %v544 = vld [vmem:[#allocation8 + $0x38] sm:$0xff]
          %v545 = vld [vmem:[#allocation8 + $0x40] sm:$0xff]
          %v546 = vld [vmem:[#allocation8 + $0x48] sm:$0xff]
          %v547 = vld [vmem:[#allocation8 + $0x50] sm:$0xff]
          %v548 = vld [vmem:[#allocation8 + $0x58] sm:$0xff]
          %v549 = vld [vmem:[#allocation8 + $0x60] sm:$0xff]
          %v550 = vld [vmem:[#allocation8 + $0x68] sm:$0xff]
          %v551 = vld [vmem:[#allocation8 + $0x70] sm:$0xff]
          %v552 = vld [vmem:[#allocation8 + $0x78] sm:$0xff]
          %v553 = vld [vmem:[#allocation8 + $0x80] sm:$0xff]
          %v554 = vld [vmem:[#allocation8 + $0x88] sm:$0xff]
          %v555 = vld [vmem:[#allocation8 + $0x90] sm:$0xff]
          %v556 = vld [vmem:[#allocation8 + $0x98] sm:$0xff]
          %v557 = vld [vmem:[#allocation8 + $0xa0] sm:$0xff]
          %v558 = vld [vmem:[#allocation8 + $0xa8] sm:$0xff]
          %v559 = vld [vmem:[#allocation8 + $0xb0] sm:$0xff]
          %v560 = vld [vmem:[#allocation8 + $0xb8] sm:$0xff]
          %v561 = vld [vmem:[#allocation8 + $0xc0] sm:$0xff]
          %v562 = vld [vmem:[#allocation8 + $0xc8] sm:$0xff]
          %v563 = vld [vmem:[#allocation8 + $0xd0] sm:$0xff]
          %v564 = vld [vmem:[#allocation8 + $0xd8] sm:$0xff]
          %v565 = vld [vmem:[#allocation8 + $0xe0] sm:$0xff]
          %v566 = vld [vmem:[#allocation8 + $0xe8] sm:$0xff]
          %v567 = vld [vmem:[#allocation8 + $0xf0] sm:$0xff]
          %v568 = vld [vmem:[#allocation8 + $0xf8] sm:$0xff]
          %v569 = vld [vmem:[%s5] sm:$0xf]
          %571 = vset.pattern.permute.xlu0 0
          %572 = vperm.xlu0 %571, %v569
          %v573 = vpop.permute.xlu0 %572
          %575 = vmatprep.subr.mxu0 %v538
          %576 = vmatpush1.msra.mxu0 %v537
          %577 = vmatprep.subr.mxu0 %v540
          %578 = vmatpush1.msra.mxu0 %v539
          %579 = vmatprep.subr.mxu0 %v542
          %580 = vmatpush1.msra.mxu0 %v541
          %581 = vmatprep.subr.mxu0 %v544
          %582 = vmatpush1.msra.mxu0 %v543
          %583 = vmatprep.subr.mxu0 %v546
          %584 = vmatpush1.msra.mxu0 %v545
          %585 = vmatprep.subr.mxu0 %v548
          %586 = vmatpush1.msra.mxu0 %v547
          %587 = vmatprep.subr.mxu0 %v550
          %588 = vmatpush1.msra.mxu0 %v549
          %589 = vmatprep.subr.mxu0 %v552
          %590 = vmatpush1.msra.mxu0 %v551
          %591 = vmatprep.subr.mxu0 %v554
          %592 = vmatpush1.msra.mxu0 %v553
          %593 = vmatprep.subr.mxu0 %v556
          %594 = vmatpush1.msra.mxu0 %v555
          %595 = vmatprep.subr.mxu0 %v558
          %596 = vmatpush1.msra.mxu0 %v557
          %597 = vmatprep.subr.mxu0 %v560
          %598 = vmatpush1.msra.mxu0 %v559
          %599 = vmatprep.subr.mxu0 %v562
          %600 = vmatpush1.msra.mxu0 %v561
          %601 = vmatprep.subr.mxu0 %v564
          %602 = vmatpush1.msra.mxu0 %v563
          %603 = vmatprep.subr.mxu0 %v566
          %604 = vmatpush1.msra.mxu0 %v565
          %605 = vmatprep.subr.mxu0 %v568
          %606 = vmatpush1.msra.mxu0 %v567
          %607 = vmatprep.subr.mxu0 0.0
          %608 = vmatpush1.msra.mxu0 0.0
          %609 = vmatprep.subr.mxu0 0.0
          %610 = vmatpush1.msra.mxu0 0.0
          %611 = vmatprep.subr.mxu0 0.0
          %612 = vmatpush1.msra.mxu0 0.0
          %613 = vmatprep.subr.mxu0 0.0
          %614 = vmatpush1.msra.mxu0 0.0
          %615 = vmatprep.subr.mxu0 0.0
          %616 = vmatpush1.msra.mxu0 0.0
          %617 = vmatprep.subr.mxu0 0.0
          %618 = vmatpush1.msra.mxu0 0.0
          %619 = vmatprep.subr.mxu0 0.0
          %620 = vmatpush1.msra.mxu0 0.0
          %621 = vmatprep.subr.mxu0 0.0
          %622 = vmatpush1.msra.mxu0 0.0
          %623 = vmatprep.subr.mxu0 0.0
          %624 = vmatpush1.msra.mxu0 0.0
          %625 = vmatprep.subr.mxu0 0.0
          %626 = vmatpush1.msra.mxu0 0.0
          %627 = vmatprep.subr.mxu0 0.0
          %628 = vmatpush1.msra.mxu0 0.0
          %629 = vmatprep.subr.mxu0 0.0
          %630 = vmatpush1.msra.mxu0 0.0
          %631 = vmatprep.subr.mxu0 0.0
          %632 = vmatpush1.msra.mxu0 0.0
          %633 = vmatprep.subr.mxu0 0.0
          %634 = vmatpush1.msra.mxu0 0.0
          %635 = vmatprep.subr.mxu0 0.0
          %636 = vmatpush1.msra.mxu0 0.0
          %637 = vmatprep.subr.mxu0 0.0
          %638 = vmatpush1.msra.mxu0 0.0
          %639 = vmatprep.mubr.f32.mxu0 0.0
          %640 = vmatmul.mubr.f32.gmra.mrb[0].mxu0 %v536
          %v641 = vpop.f32.mrb[0].mxu0
          %v642 = vadd.f32 %v573, %v641
          %v643 = vpop.f32.mrb[0].mxu0
          %v644 = vadd.f32 %v573, %v643
          %645 = vdwg.mxu0
          %v648 = vcombine.low %v642, %v644
          %650 = vst [vmem:[%s325] sm:$0xff] %v648
        $region64: #{tpu_custom_call.1} parent=43 // pred_fallthru
          _
        %s651 = sand.u32 %s182, 1
        %s652 = scalar_lea.sflag [#allocation5], %s651
        %s653 = sand.u32 %s182, 1
        %s654 = smul.addr %s653, 8
        %s655 = scalar_lea.vmem [#allocation9], %s654
        // Predicated region
        $region65: #{tpu_custom_call.1} parent=43 // pred_check
          %p656 = pneg %p192
        $region66: #{tpu_custom_call.1} parent=43 // pred_check_branch
          %658 = sbr.rel (%p656) target = $region68
        $region67: #{tpu_custom_call.1} parent=43 // pred_region
          %s660 = ssub.s32 128, 128
          %661 = vsyncadd %s652, %s660
          %s662 = smul.addr %s28, 2
          %s663 = smul.addr %s662, 64
          %s664 = scalar_lea.hbm %s6, %s663
          %s666 = sshll.u32 %s655, 4
          %s667 = int_to_ptr.vmem [resolvable:$true] %s666
          %669 = dma.vmem_to_hbm [thread:$0]  %s667, 128, %s664, %s652
        $region68: #{tpu_custom_call.1} parent=43 // pred_fallthru
          _
      $region44: #{tpu_custom_call.1} parent=5 // pred_fallthru
        _
      %p670 = scmp.le.s32.totalorder 2, %s19
      // Predicated region
      $region69: #{tpu_custom_call.1} parent=5 // pred_check
        %p671 = pneg %p670
      $region70: #{tpu_custom_call.1} parent=5 // pred_check_branch
        %673 = sbr.rel (%p671) target = $region72
      $region71: #{tpu_custom_call.1} parent=5 // pred_region
        %s674 = ssub.s32 %s19, 2
        // Predicated region
        $region73: #{tpu_custom_call.1} parent=71 // pred_check
          %p675 = pneg %p198
        $region74: #{tpu_custom_call.1} parent=71 // pred_check_branch
          %677 = sbr.rel (%p675) target = $region76
        $region75: #{tpu_custom_call.1} parent=71 // pred_region
          %s678 = sand.u32 %s183, 1
          %s679 = scalar_lea.sflag [#allocation5], %s678
          %s680 = sand.u32 %s183, 1
          %s681 = smul.addr %s680, 8
          %s682 = scalar_lea.vmem [#allocation9], %s681
          %683 = dma.done %s679, 128
        $region76: #{tpu_custom_call.1} parent=71 // pred_fallthru
          _
      $region72: #{tpu_custom_call.1} parent=5 // pred_fallthru
        _
    $region6: #{tpu_custom_call.1} parent=1 // loop_footer
      %s23 = sadd.s32 1, %s19
    $region7: #{tpu_custom_call.1} parent=1 // loop_footer_branch
      %18 = sbr.rel target = $region3
    $region8: #{tpu_custom_call.1} parent=1 // loop_exit
      _
    %684 = vsyncpa [#allocation4], 1
    %s685 = scalar_lea.sflag [#allocation4], 1
    %686 = vsyncpa %s685, 1
    %687 = vsyncpa [#allocation7], 1
    %688 = vsyncpa [#allocation5], 1
    %s689 = scalar_lea.sflag [#allocation5], 1
    %690 = vsyncpa %s689, 1

</llo_original>
